<compile_context>
chip_gen: v7x
topology: tpu7x:2x2x1
jax: 0.10.0
libtpu: 0.0.40
codegen_flags: <defaults>
</compile_context>

<pallas_src>
import functools

import jax
import jax.numpy as jnp
from jax.experimental import pallas as pl
from jax.experimental.pallas import tpu as pltpu


# ---------------------------------------------------------------------------
# The single fused kernel.  Layers are recovered from the packed slabs with
# static (Python-int) slices; metadata is passed as static kwargs.
#   conv_meta : tuple of (w_row_off, w_rows, cols, bias_row)
#   first_meta: (ws_off, ws_rows, we_off, we_rows, cols, bias_row)
#   rest_meta : tuple of (w_row_off, w_rows, cols, bias_row)
# ---------------------------------------------------------------------------
def _fused_cnn_kernel(x_ref, state_ref, w_ref, b_ref, o_ref, *,
                      conv_meta, first_meta, rest_meta):
    bf16 = jnp.bfloat16

    def w_at(off, rows, cols):                  # static-offset view -> single load
        return w_ref[off:off + rows, 0:cols]

    def b_at(row, cols):                        # (1, cols) f32 bias row
        return b_ref[row:row + 1, 0:cols]

    # Conv1d + ReLU layers: one bf16 MXU matmul each (Toeplitz-folded weights),
    # f32 accumulation, f32 elementwise bias/ReLU.
    h = x_ref[...]                                                  # (B, L*C_in) f32
    for (off, rows, cols, brow) in conv_meta:
        h = (jnp.dot(h.astype(bf16), w_at(off, rows, cols),
                     preferred_element_type=jnp.float32)
             + b_at(brow, cols))
        h = jnp.maximum(h, 0.0)                                     # ReLU after every Conv1d

    # First Linear consumes [state | encoded_actions] without materialising a
    # concat: kept split so state@Ws overlaps the serial conv critical path.
    ws_off, ws_rows, we_off, we_rows, cols1, brow1 = first_meta
    n_lin = 1 + len(rest_meta)
    y = (jnp.dot(state_ref[...].astype(bf16), w_at(ws_off, ws_rows, cols1),
                 preferred_element_type=jnp.float32)
         + jnp.dot(h.astype(bf16), w_at(we_off, we_rows, cols1),
                   preferred_element_type=jnp.float32)
         + b_at(brow1, cols1))
    if n_lin > 1:
        y = jnp.maximum(y, 0.0)

    # Remaining Linear layers; last activation is Identity (matches the module).
    for i, (off, rows, cols, brow) in enumerate(rest_meta):
        y = (jnp.dot(y.astype(bf16), w_at(off, rows, cols),
                     preferred_element_type=jnp.float32)
             + b_at(brow, cols))
        if i < len(rest_meta) - 1:
            y = jnp.maximum(y, 0.0)

    o_ref[...] = y.astype(o_ref.dtype)                              # single final store


def cnn_forward(params, state, actions, *, meta):
    """state: (B, state_dim), actions: (B, L, C_in) -> (B, n_neurons[-1])."""
    conv_meta, first_meta, rest_meta, d_out = meta
    B, L, C_in = actions.shape
    # Row-major flatten (layout-only): index l*C_in + c matches the Toeplitz row order.
    x_flat = actions.reshape(B, L * C_in)
    w_slab, b_slab = params["w_slab"], params["b_slab"]

    # Advisory cost estimate so XLA schedules the tiny custom call tightly.
    flops = 0
    for _, rows, cols, _ in conv_meta:
        flops += 2 * B * rows * cols
    ws_off, ws_rows, we_off, we_rows, cols1, _ = first_meta
    flops += 2 * B * (ws_rows + we_rows) * cols1
    for _, rows, cols, _ in rest_meta:
        flops += 2 * B * rows * cols
    bytes_accessed = (x_flat.size * x_flat.dtype.itemsize
                      + state.size * state.dtype.itemsize
                      + w_slab.size * w_slab.dtype.itemsize
                      + b_slab.size * b_slab.dtype.itemsize
                      + B * d_out * 4)

    kern = functools.partial(_fused_cnn_kernel, conv_meta=conv_meta,
                             first_meta=first_meta, rest_meta=rest_meta)
    return pl.pallas_call(
        kern,
        out_shape=jax.ShapeDtypeStruct((B, d_out), jnp.float32),
        in_specs=[pl.BlockSpec(memory_space=pltpu.MemorySpace.VMEM)] * 4,
        out_specs=pl.BlockSpec(memory_space=pltpu.MemorySpace.VMEM),
        cost_estimate=pl.CostEstimate(flops=flops, transcendentals=0,
                                      bytes_accessed=bytes_accessed),
    )(x_flat, state, w_slab, b_slab)


# ---------------------------------------------------------------------------
# Parameter init in PyTorch layout + init-time conversion to packed kernel layout.
# ---------------------------------------------------------------------------
def init_torch_layout_params(key, n_channels, n_neurons, kernel_size):
    """Synthetic params in PyTorch's native layouts: Conv1d (C_out, C_in, K),
    Linear (D_out, D_in)."""
    conv, lin = [], []
    for c_in, c_out in zip(n_channels[:-1], n_channels[1:]):
        key, kw, kb = jax.random.split(key, 3)
        conv.append((0.1 * jax.random.normal(kw, (c_out, c_in, kernel_size), jnp.float32),
                     0.1 * jax.random.normal(kb, (c_out,), jnp.float32)))
    for d_in, d_out in zip(n_neurons[:-1], n_neurons[1:]):
        key, kw, kb = jax.random.split(key, 3)
        lin.append((0.1 * jax.random.normal(kw, (d_out, d_in), jnp.float32),
                    0.1 * jax.random.normal(kb, (d_out,), jnp.float32)))
    return {"conv": conv, "linear": lin}


def conv1d_as_dense(w_torch, b_torch, l_in):
    """Expand a valid/stride-1 Conv1d into a dense Toeplitz matmul:
       y_flat[b, t*C_out + o] = sum_{l,c} x_flat[b, l*C_in + c] * W[l*C_in+c, t*C_out+o] + b[o]."""
    C_out, C_in, K = w_torch.shape
    L_out = l_in - K + 1
    w_jco = jnp.transpose(w_torch, (2, 1, 0))                 # [j, c, o] = w_torch[o, c, j]
    W = jnp.zeros((l_in, C_in, L_out, C_out), jnp.float32)
    for t in range(L_out):                                    # tiny static loop, init-time only
        W = W.at[t:t + K, :, t, :].set(w_jco)
    W = W.reshape(l_in * C_in, L_out * C_out)
    b = jnp.tile(b_torch, L_out)                              # index t*C_out + o
    return W, b, L_out


def to_kernel_params(tparams, l_in, state_dim, weight_dtype=jnp.bfloat16):
    """Fold convs into Toeplitz matmuls, fold torch's transpose/flatten/concat into a
    split + row-permuted first-Linear weight, then pack EVERYTHING into one bf16
    weight slab + one f32 bias slab (static row offsets returned as `meta`)."""
    mats, biases = [], []
    conv_ids = []
    L = l_in
    for w, b in tparams["conv"]:
        Wd, bvec, L = conv1d_as_dense(w, b, L)
        conv_ids.append((len(mats), len(biases)))
        mats.append(Wd)
        biases.append(bvec)
    C_last = tparams["conv"][-1][0].shape[0]
    L_out = L

    w1, b1 = tparams["linear"][0]                             # (D1, state_dim + C_last*L_out)
    D1 = w1.shape[0]
    Wfull = jnp.asarray(w1, jnp.float32).T                    # (state_dim + enc_dim, D1)
    Ws = Wfull[:state_dim]
    # torch flatten order is c*L_out + t; kernel enc order is t*C_last + c -> permute rows.
    We = jnp.transpose(Wfull[state_dim:].reshape(C_last, L_out, D1),
                       (1, 0, 2)).reshape(L_out * C_last, D1)
    first_ids = (len(mats), len(mats) + 1, len(biases))
    mats += [Ws, We]
    biases.append(jnp.asarray(b1, jnp.float32))

    rest_ids = []
    for w, b in tparams["linear"][1:]:
        rest_ids.append((len(mats), len(biases)))
        mats.append(jnp.asarray(w, jnp.float32).T)
        biases.append(jnp.asarray(b, jnp.float32))

    # ---- Pack: one contiguous weight slab (bf16) + one bias slab (f32). ----
    row_align = 8 * (4 // jnp.dtype(weight_dtype).itemsize)   # 16 rows for bf16, 8 for f32
    col_w = ((max(int(m.shape[1]) for m in mats) + 127) // 128) * 128
    offs, total = [], 0
    for m in mats:
        offs.append(total)
        total += ((int(m.shape[0]) + row_align - 1) // row_align) * row_align
    w_slab = jnp.zeros((max(total, row_align), col_w), weight_dtype)
    for m, off in zip(mats, offs):
        w_slab = w_slab.at[off:off + m.shape[0], :m.shape[1]].set(m.astype(weight_dtype))

    b_col = ((max(int(b.shape[0]) for b in biases) + 127) // 128) * 128
    b_slab = jnp.zeros((len(biases), b_col), jnp.float32)
    for i, b in enumerate(biases):
        b_slab = b_slab.at[i, :b.shape[0]].set(b)

    # ---- VMEM budget check for the Toeplitz expansion (binds first on v7x 64 MiB). ----
    slab_bytes = (w_slab.size * w_slab.dtype.itemsize + b_slab.size * b_slab.dtype.itemsize)
    try:
        vmem_cap = int(pltpu.get_tpu_info().vmem_capacity_bytes)
    except Exception:
        vmem_cap = 64 << 20                                   # assume the smallest (v7x per-TC)
    if 2 * slab_bytes > vmem_cap // 2:                        # headroom for buffers/activations
        # TODO(synk): for large L / channel counts the Toeplitz expansion blows up VMEM;
        # switch to an in-kernel im2col / BlockSpec-tiled conv with a "parallel" row-tile
        # grid axis (engages v7x's two TensorCores) and raise vmem_limit_bytes via
        # pltpu.CompilerParams.
        raise NotImplementedError(
            f"Toeplitz-folded parameter slab ({slab_bytes} B) exceeds VMEM budget "
            f"({vmem_cap} B); tiled conv path not implemented.")

    # ---- Static metadata (hashable nested tuples -> jit static arg). ----
    def rec(mi, bi):
        return (offs[mi], int(mats[mi].shape[0]), int(mats[mi].shape[1]), bi)
    conv_meta = tuple(rec(mi, bi) for mi, bi in conv_ids)
    ws_i, we_i, b1_i = first_ids
    first_meta = (offs[ws_i], int(mats[ws_i].shape[0]),
                  offs[we_i], int(mats[we_i].shape[0]),
                  int(mats[ws_i].shape[1]), b1_i)
    rest_meta = tuple(rec(mi, bi) for mi, bi in rest_ids)
    d_out = int(biases[-1].shape[0])

    params = {"w_slab": w_slab, "b_slab": b_slab}
    meta = (conv_meta, first_meta, rest_meta, d_out)
    return params, meta


# ---------------------------------------------------------------------------
# PyTorch-faithful pure-JAX reference (NCL conv, (C_out, L_out) flatten, concat).
# ---------------------------------------------------------------------------
def torch_reference_forward(tparams, state, actions):
    x = jnp.transpose(actions, (0, 2, 1))                     # actions.transpose(1, 2)
    for w, b in tparams["conv"]:
        C_out, C_in, K = w.shape
        L = x.shape[-1]
        L_out = L - K + 1
        y = jnp.zeros((x.shape[0], C_out, L_out), jnp.float32)
        for j in range(K):
            y = y + jnp.einsum("bcl,oc->bol", x[:, :, j:j + L_out], w[:, :, j],
                               precision=jax.lax.Precision.HIGHEST)
        x = jnp.maximum(y + b[None, :, None], 0.0)
    enc = x.reshape(x.shape[0], -1)
    h = jnp.concatenate([state, enc], axis=1)
    n_lin = len(tparams["linear"])
    for i, (w, b) in enumerate(tparams["linear"]):
        h = jnp.dot(h, w.T, precision=jax.lax.Precision.HIGHEST) + b
        if i < n_lin - 1:
            h = jnp.maximum(h, 0.0)
    return h


if __name__ == "__main__":
    key = jax.random.PRNGKey(0)

    # Small shapes consistent with the module.
    B = 2
    L = 8                        # action sequence length
    n_channels = [4, 8, 8]       # Conv1d channels (2 conv layers)
    kernel_size = 3
    state_dim = 16

    n_conv_layers = len(n_channels) - 1
    L_out = L - (kernel_size - 1) * n_conv_layers             # 8 - 4 = 4
    enc_dim = n_channels[-1] * L_out                          # 8 * 4 = 32
    n_neurons = [state_dim + enc_dim, 32, 8]                  # MLP sizes

    kp, ks, ka = jax.random.split(key, 3)
    tparams = init_torch_layout_params(kp, n_channels, n_neurons, kernel_size)
    state = jax.random.normal(ks, (B, state_dim), jnp.float32)
    actions = jax.random.normal(ka, (B, L, n_channels[0]), jnp.float32)

    kparams, meta = to_kernel_params(tparams, L, state_dim)

    fwd = jax.jit(cnn_forward, static_argnames=("meta",))
    out = jax.block_until_ready(fwd(kparams, state, actions, meta=meta))
    assert out.shape == (B, n_neurons[-1]), out.shape

    # Verify against the PyTorch-faithful f32 reference (bf16 weights -> 2e-2 tol).
    ref = jax.block_until_ready(torch_reference_forward(tparams, state, actions))
    max_err = float(jnp.max(jnp.abs(out - ref)))
    assert max_err < 2e-2, f"mismatch vs reference: max|diff|={max_err}"

    print("KERNEL_OK")
</pallas_src>

<mosaic_0001>
module attributes {stable_mosaic.version = 11 : i64} {
  func.func @_fused_cnn_kernel(%arg0: memref<2x32xf32, #tpu.memory_space<vmem>>, %arg1: memref<2x16xf32, #tpu.memory_space<vmem>>, %arg2: memref<160x128xbf16, #tpu.memory_space<vmem>>, %arg3: memref<4x128xf32, #tpu.memory_space<vmem>>, %arg4: memref<2x8xf32, #tpu.memory_space<vmem>>) attributes {dimension_semantics = [], scalar_prefetch = 0 : i64, scratch_operands = 0 : i64, tpu.core_type = #tpu.core_type<tc>} {
    %c0 = arith.constant 0 : index
    %c0_0 = arith.constant 0 : index
    %0 = vector.load %arg0[%c0, %c0_0] : memref<2x32xf32, #tpu.memory_space<vmem>>, vector<2x32xf32>
    %1 = arith.truncf %0 : vector<2x32xf32> to vector<2x32xbf16>
    %c0_1 = arith.constant 0 : index
    %c0_2 = arith.constant 0 : index
    %2 = vector.load %arg2[%c0_1, %c0_2] : memref<160x128xbf16, #tpu.memory_space<vmem>>, vector<32x48xbf16>
    %cst = arith.constant dense<0.000000e+00> : vector<2x48xf32>
    %3 = tpu.matmul %1, %2, %cst {dimension_numbers = #tpu.dot_dimension_numbers<[1], [0], [0], [1], [0, 0, 1, 1], [], []>} : vector<2x32xbf16>, vector<32x48xbf16>, vector<2x48xf32> -> vector<2x48xf32>
    %c0_3 = arith.constant 0 : index
    %c0_4 = arith.constant 0 : index
    %4 = vector.load %arg3[%c0_3, %c0_4] : memref<4x128xf32, #tpu.memory_space<vmem>>, vector<1x48xf32>
    %5 = vector.broadcast %4 : vector<1x48xf32> to vector<2x48xf32>
    %6 = arith.addf %3, %5 : vector<2x48xf32>
    %cst_5 = arith.constant 0.000000e+00 : f32
    %7 = vector.broadcast %cst_5 : f32 to vector<2x48xf32>
    %8 = arith.maximumf %6, %7 : vector<2x48xf32>
    %9 = arith.truncf %8 : vector<2x48xf32> to vector<2x48xbf16>
    %c32 = arith.constant 32 : index
    %c0_6 = arith.constant 0 : index
    %10 = vector.load %arg2[%c32, %c0_6] : memref<160x128xbf16, #tpu.memory_space<vmem>>, vector<48x32xbf16>
    %cst_7 = arith.constant dense<0.000000e+00> : vector<2x32xf32>
    %11 = tpu.matmul %9, %10, %cst_7 {dimension_numbers = #tpu.dot_dimension_numbers<[1], [0], [0], [1], [0, 0, 1, 1], [], []>} : vector<2x48xbf16>, vector<48x32xbf16>, vector<2x32xf32> -> vector<2x32xf32>
    %c1 = arith.constant 1 : index
    %c0_8 = arith.constant 0 : index
    %12 = vector.load %arg3[%c1, %c0_8] : memref<4x128xf32, #tpu.memory_space<vmem>>, vector<1x32xf32>
    %13 = vector.broadcast %12 : vector<1x32xf32> to vector<2x32xf32>
    %14 = arith.addf %11, %13 : vector<2x32xf32>
    %cst_9 = arith.constant 0.000000e+00 : f32
    %15 = vector.broadcast %cst_9 : f32 to vector<2x32xf32>
    %16 = arith.maximumf %14, %15 : vector<2x32xf32>
    %c0_10 = arith.constant 0 : index
    %c0_11 = arith.constant 0 : index
    %17 = vector.load %arg1[%c0_10, %c0_11] : memref<2x16xf32, #tpu.memory_space<vmem>>, vector<2x16xf32>
    %18 = arith.truncf %17 : vector<2x16xf32> to vector<2x16xbf16>
    %c80 = arith.constant 80 : index
    %c0_12 = arith.constant 0 : index
    %19 = vector.load %arg2[%c80, %c0_12] : memref<160x128xbf16, #tpu.memory_space<vmem>>, vector<16x32xbf16>
    %cst_13 = arith.constant dense<0.000000e+00> : vector<2x32xf32>
    %20 = tpu.matmul %18, %19, %cst_13 {dimension_numbers = #tpu.dot_dimension_numbers<[1], [0], [0], [1], [0, 0, 1, 1], [], []>} : vector<2x16xbf16>, vector<16x32xbf16>, vector<2x32xf32> -> vector<2x32xf32>
    %21 = arith.truncf %16 : vector<2x32xf32> to vector<2x32xbf16>
    %c96 = arith.constant 96 : index
    %c0_14 = arith.constant 0 : index
    %22 = vector.load %arg2[%c96, %c0_14] : memref<160x128xbf16, #tpu.memory_space<vmem>>, vector<32x32xbf16>
    %cst_15 = arith.constant dense<0.000000e+00> : vector<2x32xf32>
    %23 = tpu.matmul %21, %22, %cst_15 {dimension_numbers = #tpu.dot_dimension_numbers<[1], [0], [0], [1], [0, 0, 1, 1], [], []>} : vector<2x32xbf16>, vector<32x32xbf16>, vector<2x32xf32> -> vector<2x32xf32>
    %24 = arith.addf %20, %23 : vector<2x32xf32>
    %c2 = arith.constant 2 : index
    %c0_16 = arith.constant 0 : index
    %25 = vector.load %arg3[%c2, %c0_16] : memref<4x128xf32, #tpu.memory_space<vmem>>, vector<1x32xf32>
    %26 = vector.broadcast %25 : vector<1x32xf32> to vector<2x32xf32>
    %27 = arith.addf %24, %26 : vector<2x32xf32>
    %cst_17 = arith.constant 0.000000e+00 : f32
    %28 = vector.broadcast %cst_17 : f32 to vector<2x32xf32>
    %29 = arith.maximumf %27, %28 : vector<2x32xf32>
    %30 = arith.truncf %29 : vector<2x32xf32> to vector<2x32xbf16>
    %c128 = arith.constant 128 : index
    %c0_18 = arith.constant 0 : index
    %31 = vector.load %arg2[%c128, %c0_18] : memref<160x128xbf16, #tpu.memory_space<vmem>>, vector<32x8xbf16>
    %cst_19 = arith.constant dense<0.000000e+00> : vector<2x8xf32>
    %32 = tpu.matmul %30, %31, %cst_19 {dimension_numbers = #tpu.dot_dimension_numbers<[1], [0], [0], [1], [0, 0, 1, 1], [], []>} : vector<2x32xbf16>, vector<32x8xbf16>, vector<2x8xf32> -> vector<2x8xf32>
    %c3 = arith.constant 3 : index
    %c0_20 = arith.constant 0 : index
    %33 = vector.load %arg3[%c3, %c0_20] : memref<4x128xf32, #tpu.memory_space<vmem>>, vector<1x8xf32>
    %34 = vector.broadcast %33 : vector<1x8xf32> to vector<2x8xf32>
    %35 = arith.addf %32, %34 : vector<2x8xf32>
    %c0_21 = arith.constant 0 : index
    %c0_22 = arith.constant 0 : index
    %36 = vector.load %arg4[%c0_21, %c0_22] : memref<2x8xf32, #tpu.memory_space<vmem>>, vector<2x8xf32>
    tpu.vector_store %arg4[%c0_21, %c0_22], %35 {strides = array<i32>} : memref<2x8xf32, #tpu.memory_space<vmem>>, vector<2x8xf32>,
    return
  }
}

</mosaic_0001>

<llo_original>
// kernel: cnn_forward.1
$region0: #{cnn_forward.1}
  #allocation0 [shape = 'u32[]', space=smem, size = 0x4, offset = 0x4, fixed_abs, tag = 'smem constant byte address 0x4 - core index']
  #allocation1 [shape = 'u32[144,128]{1,0:T(1,128)}', space=vmem, size = 0x12000, scoped, tag = 'internal scratch']
  %s0 = inlined_call_operand.vmem [shape: f32[2,32], index: 0, kind: input, shape index: {}]
  %s1 = inlined_call_operand.vmem [shape: f32[2,16], index: 1, kind: input, shape index: {}]
  %s2 = inlined_call_operand.hbm [shape: bf16[160,128], index: 2, kind: input, shape index: {}]
  %s3 = inlined_call_operand.vmem [shape: f32[4,128], index: 3, kind: input, shape index: {}]
  %s4 = inlined_call_operand.hbm [shape: f32[2,8], index: 4, kind: output, shape index: {}]
  %s5 = sld [smem:[#allocation0]]
  $region30: #{cnn_forward.1} parent=0
    _
  %s7 = ssub.s32 1, %s5
  %s8 = scalar_select 0, %s7, %s5
  $region1: #{cnn_forward.1} parent=0
    #allocation2 [shape = 'u8[40960]{0}', space=vmem, size = 0xa000, scoped, tag = 'input window, operand 2, single buffered']
    #allocation3 [shape = 's32[1]{0}', space=sflag, size = 0x4, scoped, tag = 'scoped memory for cnn_forward.1']
    #allocation4 [shape = 's32[1]{0}', space=sflag, size = 0x4, scoped, tag = 'scoped memory for cnn_forward.1']
    #allocation5 [shape = 'u8[1024]{0}', space=vmem, size = 0x400, scoped, tag = 'output window, operand 0, single buffered']
    %9 = vsyncpa [#allocation3], 0
    %10 = vsyncpa [#allocation4], 0
    // Predicated region
    $region2: #{cnn_forward.1} parent=1 // pred_check
      _
    $region3: #{cnn_forward.1} parent=1 // pred_check_branch
      %12 = sbr.rel (0) target = $region5
    $region4: #{cnn_forward.1} parent=1 // pred_region
      _
    $region5: #{cnn_forward.1} parent=1 // pred_fallthru
      _
    // Predicated region
    $region6: #{cnn_forward.1} parent=1 // pred_check
      _
    $region7: #{cnn_forward.1} parent=1 // pred_check_branch
      %14 = sbr.rel (0) target = $region9
    $region8: #{cnn_forward.1} parent=1 // pred_region
      _
    $region9: #{cnn_forward.1} parent=1 // pred_fallthru
      _
    // Predicated region
    $region10: #{cnn_forward.1} parent=1 // pred_check
      _
    $region11: #{cnn_forward.1} parent=1 // pred_check_branch
      %16 = sbr.rel (0) target = $region13
    $region12: #{cnn_forward.1} parent=1 // pred_region
      %s18 = ssub.s32 1280, 1280
      %19 = vsyncadd [#allocation3], %s18
      %s20 = sshll.u32 [#allocation2], 4
      %s21 = int_to_ptr.vmem [resolvable:$true] %s20
      %26 = dma.hbm_to_vmem [thread:$0]  %s2, 1280, %s21, [#allocation3], 64, 64, 4
    $region13: #{cnn_forward.1} parent=1 // pred_fallthru
      _
    // Predicated region
    $region14: #{cnn_forward.1} parent=1 // pred_check
      _
    $region15: #{cnn_forward.1} parent=1 // pred_check_branch
      %28 = sbr.rel (0) target = $region17
    $region16: #{cnn_forward.1} parent=1 // pred_region
      _
    $region17: #{cnn_forward.1} parent=1 // pred_fallthru
      _
    // Predicated region
    $region18: #{cnn_forward.1} parent=1 // pred_check
      _
    $region19: #{cnn_forward.1} parent=1 // pred_check_branch
      %30 = sbr.rel (0) target = $region21
    $region20: #{cnn_forward.1} parent=1 // pred_region
      %31 = dma.done [#allocation3], 1280
    $region21: #{cnn_forward.1} parent=1 // pred_fallthru
      _
    %v33 = vld [vmem:[%s0] sm:$0x3]
    %v34 = vpack.c.bf16 %v33, %v33
    %v35 = vld [vmem:[#allocation2] sm:$0xf]
    %v36 = vld [vmem:[#allocation2 + $0x4] sm:$0xf]
    %v37 = vld [vmem:[#allocation2 + $0x8] sm:$0xf]
    %v38 = vld [vmem:[#allocation2 + $0xc] sm:$0xf]
    %v39 = vld [vmem:[%s3] sm:$0x1]
    %v40 = vlaneseq
    %v41 = vshrl.u32 %v40, 7
    %v42 = vsub.s32 0, %v41
    %v43 = vrot.slane %v39, %v42
    %v48 = vunpack.c.l.b16 %v35
    %v49 = vunpack.c.l.b16 %v36
    %v50 = vunpack.c.l.b16 %v37
    %v51 = vunpack.c.l.b16 %v38
    %v52 = vpack.c.b16 %v49, %v48
    %v53 = vpack.c.b16 %v51, %v50
    %vm56 = vcmask 261120
    %v58 = vsel %vm56, %v34, 0
    %60 = vmatprep.subr.bf16.mxu0 0
    %61 = vmatpush1.bf16.msra.mxu0 %v52
    %62 = vmatprep.subr.bf16.mxu0 0
    %63 = vmatpush1.bf16.msra.mxu0 %v53
    %64 = vmatprep.subr.bf16.mxu0 0
    %65 = vmatpush1.bf16.msra.mxu0 0
    %66 = vmatprep.subr.bf16.mxu0 0
    %67 = vmatpush1.bf16.msra.mxu0 0
    %68 = vmatprep.subr.bf16.mxu0 0
    %69 = vmatpush1.bf16.msra.mxu0 0
    %70 = vmatprep.subr.bf16.mxu0 0
    %71 = vmatpush1.bf16.msra.mxu0 0
    %72 = vmatprep.subr.bf16.mxu0 0
    %73 = vmatpush1.bf16.msra.mxu0 0
    %74 = vmatprep.subr.bf16.mxu0 0
    %75 = vmatpush1.bf16.msra.mxu0 0
    %76 = vmatprep.subr.bf16.mxu0 0
    %77 = vmatpush1.bf16.msra.mxu0 0
    %78 = vmatprep.subr.bf16.mxu0 0
    %79 = vmatpush1.bf16.msra.mxu0 0
    %80 = vmatprep.subr.bf16.mxu0 0
    %81 = vmatpush1.bf16.msra.mxu0 0
    %82 = vmatprep.subr.bf16.mxu0 0
    %83 = vmatpush1.bf16.msra.mxu0 0
    %84 = vmatprep.subr.bf16.mxu0 0
    %85 = vmatpush1.bf16.msra.mxu0 0
    %86 = vmatprep.subr.bf16.mxu0 0
    %87 = vmatpush1.bf16.msra.mxu0 0
    %88 = vmatprep.subr.bf16.mxu0 0
    %89 = vmatpush1.bf16.msra.mxu0 0
    %90 = vmatprep.subr.bf16.mxu0 0
    %91 = vmatpush1.bf16.msra.mxu0 0
    %92 = vmatprep.mubr.bf16.mxu0 0
    %93 = vmatmul.mubr.bf16.gmra.mrb[0].mxu0 %v58
    %v94 = vpop.f32.mrb[0].mxu0
    %v95 = vadd.f32 %v43, %v94
    %v96 = vpop.f32.mrb[0].mxu0
    %v97 = vpop.f32.mrb[0].mxu0
    %v98 = vpop.f32.mrb[0].mxu0
    %99 = vdwg.mxu0
    %v100 = vmax.f32 %v95, 0.0
    %v101 = vpack.c.bf16 %v100, %v100
    %v102 = vld [vmem:[#allocation2 + $0x10] sm:$0xf]
    %v103 = vld [vmem:[#allocation2 + $0x14] sm:$0xf]
    %v104 = vld [vmem:[#allocation2 + $0x18] sm:$0xf]
    %v105 = vld [vmem:[#allocation2 + $0x1c] sm:$0xf]
    %v106 = vld [vmem:[#allocation2 + $0x20] sm:$0xf]
    %v107 = vld [vmem:[#allocation2 + $0x24] sm:$0xf]
    %v108 = vld [vmem:[%s3 + $0x1] sm:$0x1]
    %v109 = vlaneseq
    %v110 = vshrl.u32 %v109, 7
    %v111 = vsub.s32 0, %v110
    %v112 = vrot.slane %v108, %v111
    %v119 = vunpack.c.l.b16 %v102
    %v120 = vunpack.c.l.b16 %v103
    %v121 = vunpack.c.l.b16 %v104
    %v122 = vunpack.c.l.b16 %v105
    %v123 = vunpack.c.l.b16 %v106
    %v124 = vunpack.c.l.b16 %v107
    %v125 = vpack.c.b16 %v120, %v119
    %v126 = vpack.c.b16 %v122, %v121
    %v127 = vpack.c.b16 %v124, %v123
    %vm131 = vcmask 392192
    %v133 = vsel %vm131, %v101, 0
    %135 = vmatprep.subr.bf16.mxu0 0
    %136 = vmatpush1.bf16.msra.mxu0 %v125
    %137 = vmatprep.subr.bf16.mxu0 0
    %138 = vmatpush1.bf16.msra.mxu0 %v126
    %139 = vmatprep.subr.bf16.mxu0 0
    %140 = vmatpush1.bf16.msra.mxu0 %v127
    %141 = vmatprep.subr.bf16.mxu0 0
    %142 = vmatpush1.bf16.msra.mxu0 0
    %143 = vmatprep.subr.bf16.mxu0 0
    %144 = vmatpush1.bf16.msra.mxu0 0
    %145 = vmatprep.subr.bf16.mxu0 0
    %146 = vmatpush1.bf16.msra.mxu0 0
    %147 = vmatprep.subr.bf16.mxu0 0
    %148 = vmatpush1.bf16.msra.mxu0 0
    %149 = vmatprep.subr.bf16.mxu0 0
    %150 = vmatpush1.bf16.msra.mxu0 0
    %151 = vmatprep.subr.bf16.mxu0 0
    %152 = vmatpush1.bf16.msra.mxu0 0
    %153 = vmatprep.subr.bf16.mxu0 0
    %154 = vmatpush1.bf16.msra.mxu0 0
    %155 = vmatprep.subr.bf16.mxu0 0
    %156 = vmatpush1.bf16.msra.mxu0 0
    %157 = vmatprep.subr.bf16.mxu0 0
    %158 = vmatpush1.bf16.msra.mxu0 0
    %159 = vmatprep.subr.bf16.mxu0 0
    %160 = vmatpush1.bf16.msra.mxu0 0
    %161 = vmatprep.subr.bf16.mxu0 0
    %162 = vmatpush1.bf16.msra.mxu0 0
    %163 = vmatprep.subr.bf16.mxu0 0
    %164 = vmatpush1.bf16.msra.mxu0 0
    %165 = vmatprep.subr.bf16.mxu0 0
    %166 = vmatpush1.bf16.msra.mxu0 0
    %167 = vmatprep.mubr.bf16.mxu0 0
    %168 = vmatmul.mubr.bf16.gmra.mrb[0].mxu0 %v133
    %v169 = vpop.f32.mrb[0].mxu0
    %v170 = vadd.f32 %v112, %v169
    %v171 = vpop.f32.mrb[0].mxu0
    %v172 = vpop.f32.mrb[0].mxu0
    %v173 = vpop.f32.mrb[0].mxu0
    %174 = vdwg.mxu0
    %v175 = vmax.f32 %v170, 0.0
    %v176 = vld [vmem:[%s1] sm:$0x3]
    %v177 = vpack.c.bf16 %v176, %v176
    %v178 = vld [vmem:[#allocation2 + $0x28] sm:$0xf]
    %v179 = vld [vmem:[#allocation2 + $0x2c] sm:$0xf]
    %v180 = vpack.c.bf16 %v175, %v175
    %v181 = vld [vmem:[#allocation2 + $0x30] sm:$0xf]
    %v182 = vld [vmem:[#allocation2 + $0x34] sm:$0xf]
    %v183 = vld [vmem:[#allocation2 + $0x38] sm:$0xf]
    %v184 = vld [vmem:[#allocation2 + $0x3c] sm:$0xf]
    %v189 = vunpack.c.l.b16 %v181
    %v190 = vunpack.c.l.b16 %v182
    %v191 = vunpack.c.l.b16 %v183
    %v192 = vunpack.c.l.b16 %v184
    %v193 = vpack.c.b16 %v190, %v189
    %v194 = vpack.c.b16 %v192, %v191
    %v198 = vsel %vm56, %v180, 0
    %200 = vmatprep.subr.bf16.mxu0 0
    %201 = vmatpush1.bf16.msra.mxu0 %v193
    %202 = vmatprep.subr.bf16.mxu0 0
    %203 = vmatpush1.bf16.msra.mxu0 %v194
    %204 = vmatprep.subr.bf16.mxu0 0
    %205 = vmatpush1.bf16.msra.mxu0 0
    %206 = vmatprep.subr.bf16.mxu0 0
    %207 = vmatpush1.bf16.msra.mxu0 0
    %208 = vmatprep.subr.bf16.mxu0 0
    %209 = vmatpush1.bf16.msra.mxu0 0
    %210 = vmatprep.subr.bf16.mxu0 0
    %211 = vmatpush1.bf16.msra.mxu0 0
    %212 = vmatprep.subr.bf16.mxu0 0
    %213 = vmatpush1.bf16.msra.mxu0 0
    %214 = vmatprep.subr.bf16.mxu0 0
    %215 = vmatpush1.bf16.msra.mxu0 0
    %216 = vmatprep.subr.bf16.mxu0 0
    %217 = vmatpush1.bf16.msra.mxu0 0
    %218 = vmatprep.subr.bf16.mxu0 0
    %219 = vmatpush1.bf16.msra.mxu0 0
    %220 = vmatprep.subr.bf16.mxu0 0
    %221 = vmatpush1.bf16.msra.mxu0 0
    %222 = vmatprep.subr.bf16.mxu0 0
    %223 = vmatpush1.bf16.msra.mxu0 0
    %224 = vmatprep.subr.bf16.mxu0 0
    %225 = vmatpush1.bf16.msra.mxu0 0
    %226 = vmatprep.subr.bf16.mxu0 0
    %227 = vmatpush1.bf16.msra.mxu0 0
    %228 = vmatprep.subr.bf16.mxu0 0
    %229 = vmatpush1.bf16.msra.mxu0 0
    %230 = vmatprep.subr.bf16.mxu0 0
    %231 = vmatpush1.bf16.msra.mxu0 0
    %232 = vmatprep.mubr.bf16.mxu0 0
    %233 = vmatmul.mubr.bf16.gmra.mrb[0].mxu0 %v198
    %v234 = vpop.f32.mrb[0].mxu0
    %v235 = vadd.f32 0.0, %v234
    %v236 = vpop.f32.mrb[0].mxu0
    %v237 = vpop.f32.mrb[0].mxu0
    %v238 = vpop.f32.mrb[0].mxu0
    %239 = vdwg.mxu0
    %v242 = vunpack.c.l.b16 %v178
    %v243 = vunpack.c.l.b16 %v179
    %v244 = vpack.c.b16 %v243, %v242
    %vm246 = vcmask 130048
    %v248 = vsel %vm246, %v177, 0
    %250 = vmatprep.subr.bf16.mxu0 0
    %251 = vmatpush1.bf16.msra.mxu0 %v244
    %252 = vmatprep.subr.bf16.mxu0 0
    %253 = vmatpush1.bf16.msra.mxu0 0
    %254 = vmatprep.subr.bf16.mxu0 0
    %255 = vmatpush1.bf16.msra.mxu0 0
    %256 = vmatprep.subr.bf16.mxu0 0
    %257 = vmatpush1.bf16.msra.mxu0 0
    %258 = vmatprep.subr.bf16.mxu0 0
    %259 = vmatpush1.bf16.msra.mxu0 0
    %260 = vmatprep.subr.bf16.mxu0 0
    %261 = vmatpush1.bf16.msra.mxu0 0
    %262 = vmatprep.subr.bf16.mxu0 0
    %263 = vmatpush1.bf16.msra.mxu0 0
    %264 = vmatprep.subr.bf16.mxu0 0
    %265 = vmatpush1.bf16.msra.mxu0 0
    %266 = vmatprep.subr.bf16.mxu0 0
    %267 = vmatpush1.bf16.msra.mxu0 0
    %268 = vmatprep.subr.bf16.mxu0 0
    %269 = vmatpush1.bf16.msra.mxu0 0
    %270 = vmatprep.subr.bf16.mxu0 0
    %271 = vmatpush1.bf16.msra.mxu0 0
    %272 = vmatprep.subr.bf16.mxu0 0
    %273 = vmatpush1.bf16.msra.mxu0 0
    %274 = vmatprep.subr.bf16.mxu0 0
    %275 = vmatpush1.bf16.msra.mxu0 0
    %276 = vmatprep.subr.bf16.mxu0 0
    %277 = vmatpush1.bf16.msra.mxu0 0
    %278 = vmatprep.subr.bf16.mxu0 0
    %279 = vmatpush1.bf16.msra.mxu0 0
    %280 = vmatprep.subr.bf16.mxu0 0
    %281 = vmatpush1.bf16.msra.mxu0 0
    %282 = vmatprep.mubr.bf16.mxu0 0
    %283 = vmatmul.mubr.bf16.gmra.mrb[0].mxu0 %v248
    %v284 = vpop.f32.mrb[0].mxu0
    %v285 = vadd.f32 %v235, %v284
    %v286 = vpop.f32.mrb[0].mxu0
    %v287 = vpop.f32.mrb[0].mxu0
    %v288 = vpop.f32.mrb[0].mxu0
    %289 = vdwg.mxu0
    %v290 = vld [vmem:[%s3 + $0x2] sm:$0x1]
    %v291 = vlaneseq
    %v292 = vshrl.u32 %v291, 7
    %v293 = vsub.s32 0, %v292
    %v294 = vrot.slane %v290, %v293
    %v295 = vadd.f32 %v285, %v294
    %v296 = vmax.f32 %v295, 0.0
    %v297 = vpack.c.bf16 %v296, %v296
    %v298 = vld [vmem:[#allocation2 + $0x40] sm:$0xf]
    %v299 = vld [vmem:[#allocation2 + $0x44] sm:$0xf]
    %v300 = vld [vmem:[#allocation2 + $0x48] sm:$0xf]
    %v301 = vld [vmem:[#allocation2 + $0x4c] sm:$0xf]
    %v302 = vld [vmem:[%s3 + $0x3] sm:$0x1]
    %v303 = vlaneseq
    %v304 = vshrl.u32 %v303, 7
    %v305 = vsub.s32 0, %v304
    %v306 = vrot.slane %v302, %v305
    %v311 = vunpack.c.l.b16 %v298
    %v312 = vunpack.c.l.b16 %v299
    %v313 = vunpack.c.l.b16 %v300
    %v314 = vunpack.c.l.b16 %v301
    %v315 = vpack.c.b16 %v312, %v311
    %v316 = vpack.c.b16 %v314, %v313
    %v320 = vsel %vm56, %v297, 0
    %322 = vmatprep.subr.bf16.mxu0 0
    %323 = vmatpush1.bf16.msra.mxu0 %v315
    %324 = vmatprep.subr.bf16.mxu0 0
    %325 = vmatpush1.bf16.msra.mxu0 %v316
    %326 = vmatprep.subr.bf16.mxu0 0
    %327 = vmatpush1.bf16.msra.mxu0 0
    %328 = vmatprep.subr.bf16.mxu0 0
    %329 = vmatpush1.bf16.msra.mxu0 0
    %330 = vmatprep.subr.bf16.mxu0 0
    %331 = vmatpush1.bf16.msra.mxu0 0
    %332 = vmatprep.subr.bf16.mxu0 0
    %333 = vmatpush1.bf16.msra.mxu0 0
    %334 = vmatprep.subr.bf16.mxu0 0
    %335 = vmatpush1.bf16.msra.mxu0 0
    %336 = vmatprep.subr.bf16.mxu0 0
    %337 = vmatpush1.bf16.msra.mxu0 0
    %338 = vmatprep.subr.bf16.mxu0 0
    %339 = vmatpush1.bf16.msra.mxu0 0
    %340 = vmatprep.subr.bf16.mxu0 0
    %341 = vmatpush1.bf16.msra.mxu0 0
    %342 = vmatprep.subr.bf16.mxu0 0
    %343 = vmatpush1.bf16.msra.mxu0 0
    %344 = vmatprep.subr.bf16.mxu0 0
    %345 = vmatpush1.bf16.msra.mxu0 0
    %346 = vmatprep.subr.bf16.mxu0 0
    %347 = vmatpush1.bf16.msra.mxu0 0
    %348 = vmatprep.subr.bf16.mxu0 0
    %349 = vmatpush1.bf16.msra.mxu0 0
    %350 = vmatprep.subr.bf16.mxu0 0
    %351 = vmatpush1.bf16.msra.mxu0 0
    %352 = vmatprep.subr.bf16.mxu0 0
    %353 = vmatpush1.bf16.msra.mxu0 0
    %354 = vmatprep.mubr.bf16.mxu0 0
    %355 = vmatmul.mubr.bf16.gmra.mrb[0].mxu0 %v320
    %v356 = vpop.f32.mrb[0].mxu0
    %v357 = vadd.f32 %v306, %v356
    %v358 = vpop.f32.mrb[0].mxu0
    %v359 = vpop.f32.mrb[0].mxu0
    %v360 = vpop.f32.mrb[0].mxu0
    %361 = vdwg.mxu0
    %vm362 = vcmask 58368
    %363 = vst.msk [vmem:[#allocation5] sm:$0x3] %vm362, %v357
    // Predicated region
    $region22: #{cnn_forward.1} parent=1 // pred_check
      _
    $region23: #{cnn_forward.1} parent=1 // pred_check_branch
      %365 = sbr.rel (0) target = $region25
    $region24: #{cnn_forward.1} parent=1 // pred_region
      %s367 = ssub.s32 32, 32
      %368 = vsyncadd [#allocation4], %s367
      %s370 = sshll.u32 [#allocation5], 4
      %s371 = int_to_ptr.vmem [resolvable:$true] %s370
      %373 = dma.vmem_to_hbm [thread:$0]  %s371, 32, %s4, [#allocation4]
    $region25: #{cnn_forward.1} parent=1 // pred_fallthru
      _
    // Predicated region
    $region26: #{cnn_forward.1} parent=1 // pred_check
      _
    $region27: #{cnn_forward.1} parent=1 // pred_check_branch
      %375 = sbr.rel (0) target = $region29
    $region28: #{cnn_forward.1} parent=1 // pred_region
      %376 = dma.done [#allocation4], 32
    $region29: #{cnn_forward.1} parent=1 // pred_fallthru
      _
    %377 = vsyncpa [#allocation3], 1
    %378 = vsyncpa [#allocation4], 1

</llo_original>
